<compile_context>
chip_gen: v7x
topology: tpu7x:2x2x1
jax: 0.10.0
libtpu: 0.0.40
codegen_flags: <defaults>
</compile_context>

<pallas_src>
import functools
import math

import jax
import jax.numpy as jnp
from jax.experimental import pallas as pl
from jax.experimental.pallas import tpu as pltpu


def _cdiv(a, b):
    return (a + b - 1) // b


def _round_up(x, m):
    return _cdiv(x, m) * m


# ---------------------------------------------------------------------------
# Heuristics
# ---------------------------------------------------------------------------
_TINY_FALLBACK    = 1 << 17     # M*K*N at or below this -> plain XLA dot
_SINGLE_K_MAX     = 1024        # K <= this -> single-K-block (no accumulator)
_TM_MAX           = 1024        # max row tile
_TN_MAX_RESIDENT  = 1024        # keep whole N resident when N <= this
_VMEM_TILE_BUDGET = 20 << 20    # target double-buffered working set (bytes)
_VMEM_LIMIT       = 32 << 20    # scoped-VMEM limit handed to Mosaic


# ---------------------------------------------------------------------------
# Kernels
# ---------------------------------------------------------------------------
def _linear_bias_kernel(x_ref, w_ref, b_ref, o_ref, *, compute_dtype):
    """Single K block: o = x @ w + b.  MXU f32 accumulate, no VMEM scratch."""
    acc = jnp.dot(x_ref[...].astype(compute_dtype),
                  w_ref[...].astype(compute_dtype),
                  preferred_element_type=jnp.float32)
    o_ref[...] = (acc + b_ref[...].astype(jnp.float32)).astype(o_ref.dtype)


def _linear_bias_acc_kernel(x_ref, w_ref, b_ref, o_ref, acc_ref, *,
                            compute_dtype):
    """Large-K path: f32 VMEM accumulator across the (last) K grid axis."""
    k = pl.program_id(2)

    @pl.when(k == 0)
    def _():
        acc_ref[...] = jnp.zeros_like(acc_ref)

    acc_ref[...] += jnp.dot(x_ref[...].astype(compute_dtype),
                            w_ref[...].astype(compute_dtype),
                            preferred_element_type=jnp.float32)

    @pl.when(k == pl.num_programs(2) - 1)
    def _():
        o_ref[...] = (acc_ref[...] +
                      b_ref[...].astype(jnp.float32)).astype(o_ref.dtype)


# ---------------------------------------------------------------------------
# Tiling helpers
# ---------------------------------------------------------------------------
def _pick_tm(M, per_row_bytes, fixed_bytes):
    """Largest row tile (<= _TM_MAX) that keeps the working set in budget."""
    tm = min(_TM_MAX, M)
    while tm > 128 and fixed_bytes + tm * per_row_bytes > _VMEM_TILE_BUDGET:
        tm = _round_up(tm // 2, 8)
    tm = min(tm, M)
    # Give both v7x TensorCores work on the "parallel" i axis when M is big.
    if M >= 512 and _cdiv(M, tm) <= 1:
        tm = _round_up(_cdiv(M, 2), 8)
    return tm


# ---------------------------------------------------------------------------
# Flattened GEMM + bias
# ---------------------------------------------------------------------------
def _matmul_bias(flat, weight_t, bias, *, compute_dtype, out_dtype):
    M, K = flat.shape
    N = weight_t.shape[1]

    # Weight is small: cast once wrapper-side (halves its VMEM footprint).
    w = weight_t if weight_t.dtype == compute_dtype else weight_t.astype(compute_dtype)
    b2d = bias.astype(jnp.float32).reshape(1, N)

    out_b = jnp.dtype(out_dtype).itemsize
    cd_b = jnp.dtype(compute_dtype).itemsize

    cost = pl.CostEstimate(
        flops=2 * M * K * N,
        transcendentals=0,
        bytes_accessed=(flat.size * flat.dtype.itemsize +
                        w.size * w.dtype.itemsize +
                        b2d.size * 4 + M * N * out_b))

    if K <= _SINGLE_K_MAX:
        # ---- single-K path: weight + bias resident, x streamed once, -----
        # ---- x cast to compute_dtype in-kernel, no scratch accumulator. --
        tn = N if N <= _TN_MAX_RESIDENT else 512
        per_row = 2 * K * flat.dtype.itemsize + 2 * tn * out_b
        fixed = 2 * K * tn * cd_b + 2 * tn * 4
        tm = _pick_tm(M, per_row, fixed)
        grid = (_cdiv(M, tm), _cdiv(N, tn))   # ragged M / N blocks are fine

        return pl.pallas_call(
            functools.partial(_linear_bias_kernel, compute_dtype=compute_dtype),
            out_shape=jax.ShapeDtypeStruct((M, N), out_dtype),
            grid_spec=pltpu.PrefetchScalarGridSpec(
                num_scalar_prefetch=0,
                grid=grid,
                in_specs=[
                    pl.BlockSpec((tm, K), lambda i, j: (i, 0)),   # x rows
                    pl.BlockSpec((K, tn), lambda i, j: (0, j)),   # weight
                    pl.BlockSpec((1, tn), lambda i, j: (0, j)),   # bias
                ],
                out_specs=pl.BlockSpec((tm, tn), lambda i, j: (i, j)),
            ),
            compiler_params=pltpu.CompilerParams(
                dimension_semantics=("parallel", "parallel"),
                vmem_limit_bytes=_VMEM_LIMIT),
            cost_estimate=cost,
        )(flat, w, b2d)

    # ---- large-K path: accumulate over a K grid axis in f32 VMEM scratch --
    tk = 512
    Kp = _round_up(K, tk)
    # Pre-cast x once (it is re-read across the j/k sweeps) and fuse the cast
    # with the (rare) K zero-pad so at most one extra HBM copy is made.
    # K padding is mandatory: garbage in the contraction would corrupt output.
    x = flat if flat.dtype == compute_dtype else flat.astype(compute_dtype)
    if Kp != K:
        x = jnp.pad(x, ((0, 0), (0, Kp - K)))
        w = jnp.pad(w, ((0, Kp - K), (0, 0)))

    tn = N if N <= 512 else 512
    per_row = 2 * tk * cd_b + 2 * tn * out_b + tn * 4
    fixed = 2 * tk * tn * cd_b + 2 * tn * 4
    tm = _pick_tm(M, per_row, fixed)
    grid = (_cdiv(M, tm), _cdiv(N, tn), Kp // tk)

    return pl.pallas_call(
        functools.partial(_linear_bias_acc_kernel, compute_dtype=compute_dtype),
        out_shape=jax.ShapeDtypeStruct((M, N), out_dtype),
        grid_spec=pltpu.PrefetchScalarGridSpec(
            num_scalar_prefetch=0,
            grid=grid,
            in_specs=[
                pl.BlockSpec((tm, tk), lambda i, j, k: (i, k)),   # x tile
                pl.BlockSpec((tk, tn), lambda i, j, k: (k, j)),   # weight tile
                pl.BlockSpec((1, tn), lambda i, j, k: (0, j)),    # bias
            ],
            out_specs=pl.BlockSpec((tm, tn), lambda i, j, k: (i, j)),
            scratch_shapes=[pltpu.VMEM((tm, tn), jnp.float32)],
        ),
        compiler_params=pltpu.CompilerParams(
            dimension_semantics=("parallel", "parallel", "arbitrary"),
            vmem_limit_bytes=_VMEM_LIMIT),
        cost_estimate=cost,
    )(x, w, b2d)


# ---------------------------------------------------------------------------
# TimeDistributed wrapper (matches the PyTorch module's forward)
# ---------------------------------------------------------------------------
def time_distributed_linear(x, weight_t, bias, *, batch_first=False,
                            compute_dtype=jnp.bfloat16, out_dtype=None):
    """Pallas implementation of TimeDistributed(nn.Linear).

    x             : (T, B, F_in) if not batch_first else (B, T, F_in);
                    1-D / 2-D inputs pass straight through the Linear.
    weight_t      : (F_in, F_out)  -- nn.Linear weight transposed
    bias          : (F_out,)
    compute_dtype : MXU operand dtype (default bf16; accumulation stays f32).
    out_dtype     : output dtype (default: x.dtype).
    """
    out_dtype = x.dtype if out_dtype is None else out_dtype
    orig_ndim = x.ndim
    squeeze_1d = orig_ndim == 1

    if squeeze_1d:
        flat = x.reshape(1, -1)
    elif orig_ndim == 2:
        flat = x
    else:
        flat = x.reshape(-1, x.shape[-1])       # same as .contiguous().view(-1, F_in)

    M, K = flat.shape
    N = weight_t.shape[1]

    if M * K * N <= _TINY_FALLBACK:
        # Pallas fixed overhead dominates for tiny layers; let XLA fuse it.
        y = (jnp.dot(flat.astype(jnp.float32), weight_t.astype(jnp.float32))
             + bias.astype(jnp.float32)).astype(out_dtype)
    else:
        y = _matmul_bias(flat, weight_t, bias,
                         compute_dtype=compute_dtype, out_dtype=out_dtype)

    if squeeze_1d:
        return y.reshape(N)
    if orig_ndim <= 2:
        return y
    if batch_first:
        return y.reshape(x.shape[0], -1, N)     # y.view(x.size(0), -1, F_out)
    return y.reshape(-1, x.shape[1], N)         # y.view(-1, x.size(1), F_out)


# ---------------------------------------------------------------------------
# Self-test
# ---------------------------------------------------------------------------
def _make_linear_params(key, f_in, f_out):
    k_w, k_b = jax.random.split(key)
    bound = 1.0 / math.sqrt(f_in)
    weight = jax.random.uniform(k_w, (f_out, f_in), jnp.float32, -bound, bound)
    bias = jax.random.uniform(k_b, (f_out,), jnp.float32, -bound, bound)
    return weight.T, bias            # (F_in, F_out), (F_out,)


def _bf16_ref(x2d, w_t, b):
    xb = x2d.astype(jnp.bfloat16).astype(jnp.float32)
    wb = w_t.astype(jnp.bfloat16).astype(jnp.float32)
    return xb @ wb + b


if __name__ == "__main__":
    key = jax.random.PRNGKey(0)
    k1, k2, k3, k4, k5 = jax.random.split(key, 5)

    # --- Case 1: tiny module-default layout (seq, batch, feat) -> XLA fallback
    T, B, F_IN, F_OUT = 8, 2, 32, 32
    w1, b1 = _make_linear_params(k2, F_IN, F_OUT)
    x1 = jax.random.normal(k1, (T, B, F_IN), jnp.float32)
    y1 = jax.block_until_ready(time_distributed_linear(x1, w1, b1))
    ref1 = (x1.reshape(-1, F_IN) @ w1 + b1).reshape(-1, B, F_OUT)
    assert y1.shape == (T, B, F_OUT)
    assert jnp.allclose(y1, ref1, atol=1e-5, rtol=1e-5)

    # --- Case 2: batch_first, unaligned (M=72, K=N=160) -> Pallas single-K
    #             path, default bf16 compute, no wrapper pad/slice copies.
    B2, T2, F2 = 3, 24, 160
    w2, b2 = _make_linear_params(k4, F2, F2)
    x2 = jax.random.normal(k3, (B2, T2, F2), jnp.float32)
    y2 = jax.block_until_ready(
        time_distributed_linear(x2, w2, b2, batch_first=True))
    ref2 = _bf16_ref(x2.reshape(-1, F2), w2, b2).reshape(B2, -1, F2)
    assert y2.shape == (B2, T2, F2)
    assert y2.dtype == x2.dtype
    assert jnp.allclose(y2, ref2, atol=1e-3, rtol=1e-3)

    # --- Case 2b: same shapes, explicit f32 compute -> tight tolerance.
    y2f = jax.block_until_ready(
        time_distributed_linear(x2, w2, b2, batch_first=True,
                                compute_dtype=jnp.float32))
    ref2f = (x2.reshape(-1, F2) @ w2 + b2).reshape(B2, -1, F2)
    assert jnp.allclose(y2f, ref2f, atol=1e-5, rtol=1e-5)

    # --- Case 3: large K -> multi-K accumulator path with K zero-padding
    #             (M=128, K=1280 -> Kp=1536, ragged N=192).
    T3, B3, F_IN3, F_OUT3 = 16, 8, 1280, 192
    w3, b3 = _make_linear_params(k5, F_IN3, F_OUT3)
    x3 = jax.random.normal(k1, (T3, B3, F_IN3), jnp.float32)
    y3 = jax.block_until_ready(time_distributed_linear(x3, w3, b3))
    ref3 = _bf16_ref(x3.reshape(-1, F_IN3), w3, b3).reshape(-1, B3, F_OUT3)
    assert y3.shape == (T3, B3, F_OUT3)
    assert jnp.allclose(y3, ref3, atol=1e-3, rtol=1e-3)

    # --- Case 4: 2-D input passes straight through the Linear.
    x4 = jax.random.normal(k3, (5, F_IN), jnp.float32)
    y4 = jax.block_until_ready(time_distributed_linear(x4, w1, b1))
    ref4 = x4 @ w1 + b1
    assert y4.shape == (5, F_OUT)
    assert jnp.allclose(y4, ref4, atol=1e-5, rtol=1e-5)

    print("KERNEL_OK")
</pallas_src>

<mosaic_0001>
module attributes {stable_mosaic.version = 11 : i64} {
  func.func @_linear_bias_kernel(%arg0: i32, %arg1: i32, %arg2: memref<72x160xf32, #tpu.memory_space<vmem>>, %arg3: memref<160x160xbf16, #tpu.memory_space<vmem>>, %arg4: memref<1x160xf32, #tpu.memory_space<vmem>>, %arg5: memref<72x160xf32, #tpu.memory_space<vmem>>) attributes {dimension_semantics = [#tpu.dimension_semantics<parallel>, #tpu.dimension_semantics<parallel>], iteration_bounds = array<i64: 1, 1>, scalar_prefetch = 0 : i64, scratch_operands = 0 : i64, tpu.core_type = #tpu.core_type<tc>, window_params = [{transform_indices = @transform_0, window_bounds = array<i64: 72, 160>}, {transform_indices = @transform_1, window_bounds = array<i64: 160, 160>}, {transform_indices = @transform_2, window_bounds = array<i64: 1, 160>}, {transform_indices = @transform_3, window_bounds = array<i64: 72, 160>}]} {
    %c0 = arith.constant 0 : index
    %c0_0 = arith.constant 0 : index
    %0 = vector.load %arg2[%c0, %c0_0] : memref<72x160xf32, #tpu.memory_space<vmem>>, vector<72x160xf32>
    %1 = arith.truncf %0 : vector<72x160xf32> to vector<72x160xbf16>
    %c0_1 = arith.constant 0 : index
    %c0_2 = arith.constant 0 : index
    %2 = vector.load %arg3[%c0_1, %c0_2] : memref<160x160xbf16, #tpu.memory_space<vmem>>, vector<160x160xbf16>
    %cst = arith.constant dense<0.000000e+00> : vector<72x160xf32>
    %3 = tpu.matmul %1, %2, %cst {dimension_numbers = #tpu.dot_dimension_numbers<[1], [0], [0], [1], [0, 0, 1, 1], [], []>} : vector<72x160xbf16>, vector<160x160xbf16>, vector<72x160xf32> -> vector<72x160xf32>
    %c0_3 = arith.constant 0 : index
    %c0_4 = arith.constant 0 : index
    %4 = vector.load %arg4[%c0_3, %c0_4] : memref<1x160xf32, #tpu.memory_space<vmem>>, vector<1x160xf32>
    %5 = vector.broadcast %4 : vector<1x160xf32> to vector<72x160xf32>
    %6 = arith.addf %3, %5 : vector<72x160xf32>
    %c0_5 = arith.constant 0 : index
    %c0_6 = arith.constant 0 : index
    %7 = vector.load %arg5[%c0_5, %c0_6] : memref<72x160xf32, #tpu.memory_space<vmem>>, vector<72x160xf32>
    tpu.vector_store %arg5[%c0_5, %c0_6], %6 {strides = array<i32>} : memref<72x160xf32, #tpu.memory_space<vmem>>, vector<72x160xf32>,
    return
  }
  func.func @transform_0(%arg0: i32, %arg1: i32) -> (i32, i32) {
    %c0_i32 = arith.constant 0 : i32
    %c0_i32_0 = arith.constant 0 : i32
    return %arg0, %c0_i32 : i32, i32
  }
  func.func @transform_1(%arg0: i32, %arg1: i32) -> (i32, i32) {
    %c0_i32 = arith.constant 0 : i32
    %c0_i32_0 = arith.constant 0 : i32
    return %c0_i32, %arg1 : i32, i32
  }
  func.func @transform_2(%arg0: i32, %arg1: i32) -> (i32, i32) {
    %c0_i32 = arith.constant 0 : i32
    %c0_i32_0 = arith.constant 0 : i32
    return %c0_i32, %arg1 : i32, i32
  }
  func.func @transform_3(%arg0: i32, %arg1: i32) -> (i32, i32) {
    %c0_i32 = arith.constant 0 : i32
    return %arg0, %arg1 : i32, i32
  }
}

</mosaic_0001>

<llo_original>
// kernel: tpu_custom_call.1
$region0: #{tpu_custom_call.1}
  #allocation0 [shape = 'u32[]', space=smem, size = 0x4, offset = 0x4, fixed_abs, tag = 'smem constant byte address 0x4 - core index']
  #allocation1 [shape = 'u32[144,128]{1,0:T(1,128)}', space=vmem, size = 0x12000, scoped, tag = 'internal scratch']
  %s0 = inlined_call_operand.hbm [shape: f32[72,160], index: 0, kind: input, shape index: {}]
  %s1 = inlined_call_operand.hbm [shape: bf16[160,160], index: 1, kind: input, shape index: {}]
  %s2 = inlined_call_operand.vmem [shape: f32[1,160], index: 2, kind: input, shape index: {}]
  %s3 = inlined_call_operand.hbm [shape: f32[72,160], index: 3, kind: output, shape index: {}]
  %s4 = sld [smem:[#allocation0]]
  $region30: #{tpu_custom_call.1} parent=0
    _
  %s6 = ssub.s32 1, %s4
  %s7 = scalar_select 0, %s6, %s4
  $region1: #{tpu_custom_call.1} parent=0
    #allocation2 [shape = 'u8[73728]{0}', space=vmem, size = 0x12000, scoped, tag = 'input window, operand 0, single buffered']
    #allocation3 [shape = 's32[1]{0}', space=sflag, size = 0x4, scoped, tag = 'scoped memory for tpu_custom_call.1']
    #allocation4 [shape = 's32[1]{0}', space=sflag, size = 0x4, scoped, tag = 'scoped memory for tpu_custom_call.1']
    #allocation5 [shape = 'u8[81920]{0}', space=vmem, size = 0x14000, scoped, tag = 'input window, operand 1, single buffered']
    #allocation6 [shape = 's32[1]{0}', space=sflag, size = 0x4, scoped, tag = 'scoped memory for tpu_custom_call.1']
    #allocation7 [shape = 'u8[73728]{0}', space=vmem, size = 0x12000, scoped, tag = 'output window, operand 0, single buffered']
    %8 = vsyncpa [#allocation3], 0
    %9 = vsyncpa [#allocation6], 0
    %10 = vsyncpa [#allocation4], 0
    // Predicated region
    $region2: #{tpu_custom_call.1} parent=1 // pred_check
      _
    $region3: #{tpu_custom_call.1} parent=1 // pred_check_branch
      %12 = sbr.rel (0) target = $region5
    $region4: #{tpu_custom_call.1} parent=1 // pred_region
      %s14 = ssub.s32 2304, 2304
      %15 = vsyncadd [#allocation3], %s14
      %s16 = sshll.u32 [#allocation2], 4
      %s17 = int_to_ptr.vmem [resolvable:$true] %s16
      %22 = dma.hbm_to_vmem [thread:$0]  %s0, 2304, %s17, [#allocation3], 256, 256, 16
    $region5: #{tpu_custom_call.1} parent=1 // pred_fallthru
      _
    // Predicated region
    $region6: #{tpu_custom_call.1} parent=1 // pred_check
      _
    $region7: #{tpu_custom_call.1} parent=1 // pred_check_branch
      %24 = sbr.rel (0) target = $region9
    $region8: #{tpu_custom_call.1} parent=1 // pred_region
      %s26 = ssub.s32 2560, 2560
      %27 = vsyncadd [#allocation6], %s26
      %s28 = sshll.u32 [#allocation5], 4
      %s29 = int_to_ptr.vmem [resolvable:$true] %s28
      %34 = dma.hbm_to_vmem [thread:$0]  %s1, 2560, %s29, [#allocation6], 128, 128, 8
    $region9: #{tpu_custom_call.1} parent=1 // pred_fallthru
      _
    // Predicated region
    $region10: #{tpu_custom_call.1} parent=1 // pred_check
      _
    $region11: #{tpu_custom_call.1} parent=1 // pred_check_branch
      %36 = sbr.rel (0) target = $region13
    $region12: #{tpu_custom_call.1} parent=1 // pred_region
      _
    $region13: #{tpu_custom_call.1} parent=1 // pred_fallthru
      _
    // Predicated region
    $region14: #{tpu_custom_call.1} parent=1 // pred_check
      _
    $region15: #{tpu_custom_call.1} parent=1 // pred_check_branch
      %38 = sbr.rel (0) target = $region17
    $region16: #{tpu_custom_call.1} parent=1 // pred_region
      %39 = dma.done [#allocation3], 2304
    $region17: #{tpu_custom_call.1} parent=1 // pred_fallthru
      _
    // Predicated region
    $region18: #{tpu_custom_call.1} parent=1 // pred_check
      _
    $region19: #{tpu_custom_call.1} parent=1 // pred_check_branch
      %41 = sbr.rel (0) target = $region21
    $region20: #{tpu_custom_call.1} parent=1 // pred_region
      %42 = dma.done [#allocation6], 2560
    $region21: #{tpu_custom_call.1} parent=1 // pred_fallthru
      _
    %v44 = vld [vmem:[#allocation2] sm:$0xff]
    %v45 = vld [vmem:[#allocation2 + $0x8] sm:$0xff]
    %v46 = vld [vmem:[#allocation2 + $0x10] sm:$0xff]
    %v47 = vld [vmem:[#allocation2 + $0x18] sm:$0xff]
    %v48 = vld [vmem:[#allocation2 + $0x20] sm:$0xff]
    %v49 = vld [vmem:[#allocation2 + $0x28] sm:$0xff]
    %v50 = vld [vmem:[#allocation2 + $0x30] sm:$0xff]
    %v51 = vld [vmem:[#allocation2 + $0x38] sm:$0xff]
    %v52 = vld [vmem:[#allocation2 + $0x40] sm:$0xff]
    %v53 = vld [vmem:[#allocation2 + $0x48] sm:$0xff]
    %v54 = vld [vmem:[#allocation2 + $0x50] sm:$0xff]
    %v55 = vld [vmem:[#allocation2 + $0x58] sm:$0xff]
    %v56 = vld [vmem:[#allocation2 + $0x60] sm:$0xff]
    %v57 = vld [vmem:[#allocation2 + $0x68] sm:$0xff]
    %v58 = vld [vmem:[#allocation2 + $0x70] sm:$0xff]
    %v59 = vld [vmem:[#allocation2 + $0x78] sm:$0xff]
    %v60 = vld [vmem:[#allocation2 + $0x80] sm:$0xff]
    %v61 = vld [vmem:[#allocation2 + $0x88] sm:$0xff]
    %v62 = vpack.c.bf16 %v46, %v44
    %v63 = vpack.c.bf16 %v47, %v45
    %v64 = vpack.c.bf16 %v50, %v48
    %v65 = vpack.c.bf16 %v51, %v49
    %v66 = vpack.c.bf16 %v54, %v52
    %v67 = vpack.c.bf16 %v55, %v53
    %v68 = vpack.c.bf16 %v58, %v56
    %v69 = vpack.c.bf16 %v59, %v57
    %v70 = vpack.c.bf16 %v60, %v60
    %v71 = vpack.c.bf16 %v61, %v61
    %v72 = vld [vmem:[#allocation5] sm:$0xff]
    %v73 = vld [vmem:[#allocation5 + $0x8] sm:$0xff]
    %v74 = vld [vmem:[#allocation5 + $0x10] sm:$0xff]
    %v75 = vld [vmem:[#allocation5 + $0x18] sm:$0xff]
    %v76 = vld [vmem:[#allocation5 + $0x20] sm:$0xff]
    %v77 = vld [vmem:[#allocation5 + $0x28] sm:$0xff]
    %v78 = vld [vmem:[#allocation5 + $0x30] sm:$0xff]
    %v79 = vld [vmem:[#allocation5 + $0x38] sm:$0xff]
    %v80 = vld [vmem:[#allocation5 + $0x40] sm:$0xff]
    %v81 = vld [vmem:[#allocation5 + $0x48] sm:$0xff]
    %v82 = vld [vmem:[#allocation5 + $0x50] sm:$0xff]
    %v83 = vld [vmem:[#allocation5 + $0x58] sm:$0xff]
    %v84 = vld [vmem:[#allocation5 + $0x60] sm:$0xff]
    %v85 = vld [vmem:[#allocation5 + $0x68] sm:$0xff]
    %v86 = vld [vmem:[#allocation5 + $0x70] sm:$0xff]
    %v87 = vld [vmem:[#allocation5 + $0x78] sm:$0xff]
    %v88 = vld [vmem:[#allocation5 + $0x80] sm:$0xff]
    %v89 = vld [vmem:[#allocation5 + $0x88] sm:$0xff]
    %v90 = vld [vmem:[#allocation5 + $0x90] sm:$0xff]
    %v91 = vld [vmem:[#allocation5 + $0x98] sm:$0xff]
    %v92 = vld [vmem:[%s2] sm:$0x3]
    %v94 = vlaneseq
    %v95 = vshrl.u32 %v94, 7
    %v96 = vsub.s32 0, %v95
    %v97 = vrot.slane %v92, %v96
    %v98 = vlaneseq
    %v99 = vshrl.u32 %v98, 7
    %v100 = vsub.s32 1, %v99
    %v101 = vrot.slane %v92, %v100
    %v124 = vunpack.c.l.b16 %v72
    %v125 = vunpack.c.h.b16 %v72
    %v126 = vunpack.c.l.b16 %v73
    %v127 = vunpack.c.h.b16 %v73
    %v128 = vunpack.c.l.b16 %v74
    %v129 = vunpack.c.h.b16 %v74
    %v130 = vunpack.c.l.b16 %v75
    %v131 = vunpack.c.h.b16 %v75
    %v132 = vunpack.c.l.b16 %v76
    %v133 = vunpack.c.h.b16 %v76
    %v134 = vunpack.c.l.b16 %v77
    %v135 = vunpack.c.h.b16 %v77
    %v136 = vunpack.c.l.b16 %v78
    %v137 = vunpack.c.h.b16 %v78
    %v138 = vunpack.c.l.b16 %v79
    %v139 = vunpack.c.h.b16 %v79
    %v140 = vunpack.c.l.b16 %v80
    %v141 = vunpack.c.h.b16 %v80
    %v142 = vunpack.c.l.b16 %v81
    %v143 = vunpack.c.h.b16 %v81
    %v144 = vunpack.c.l.b16 %v82
    %v145 = vunpack.c.h.b16 %v82
    %v146 = vunpack.c.l.b16 %v83
    %v147 = vunpack.c.h.b16 %v83
    %v148 = vunpack.c.l.b16 %v84
    %v149 = vunpack.c.h.b16 %v84
    %v150 = vunpack.c.l.b16 %v85
    %v151 = vunpack.c.h.b16 %v85
    %v152 = vunpack.c.l.b16 %v86
    %v153 = vunpack.c.h.b16 %v86
    %v154 = vunpack.c.l.b16 %v87
    %v155 = vunpack.c.h.b16 %v87
    %v156 = vunpack.c.l.b16 %v88
    %v157 = vunpack.c.h.b16 %v88
    %v158 = vunpack.c.l.b16 %v89
    %v159 = vunpack.c.h.b16 %v89
    %v160 = vunpack.c.l.b16 %v90
    %v161 = vunpack.c.h.b16 %v90
    %v162 = vunpack.c.l.b16 %v91
    %v163 = vunpack.c.h.b16 %v91
    %v164 = vpack.c.b16 %v126, %v124
    %v165 = vpack.c.b16 %v127, %v125
    %v166 = vpack.c.b16 %v130, %v128
    %v167 = vpack.c.b16 %v131, %v129
    %v168 = vpack.c.b16 %v134, %v132
    %v169 = vpack.c.b16 %v135, %v133
    %v170 = vpack.c.b16 %v138, %v136
    %v171 = vpack.c.b16 %v139, %v137
    %v172 = vpack.c.b16 %v142, %v140
    %v173 = vpack.c.b16 %v143, %v141
    %v174 = vpack.c.b16 %v146, %v144
    %v175 = vpack.c.b16 %v147, %v145
    %v176 = vpack.c.b16 %v150, %v148
    %v177 = vpack.c.b16 %v151, %v149
    %v178 = vpack.c.b16 %v154, %v152
    %v179 = vpack.c.b16 %v155, %v153
    %v180 = vpack.c.b16 %v158, %v156
    %v181 = vpack.c.b16 %v159, %v157
    %v182 = vpack.c.b16 %v162, %v160
    %v183 = vpack.c.b16 %v163, %v161
    %vm204 = vcmask 261120
    %v206 = vsel %vm204, %v63, 0
    %v209 = vsel %vm204, %v65, 0
    %v212 = vsel %vm204, %v67, 0
    %v215 = vsel %vm204, %v69, 0
    %v218 = vsel %vm204, %v71, 0
    %220 = vmatprep.subr.bf16.mxu0 %v165
    %221 = vmatpush1.bf16.msra.mxu0 %v164
    %222 = vmatprep.subr.bf16.mxu0 %v167
    %223 = vmatpush1.bf16.msra.mxu0 %v166
    %224 = vmatprep.subr.bf16.mxu0 %v169
    %225 = vmatpush1.bf16.msra.mxu0 %v168
    %226 = vmatprep.subr.bf16.mxu0 %v171
    %227 = vmatpush1.bf16.msra.mxu0 %v170
    %228 = vmatprep.subr.bf16.mxu0 %v173
    %229 = vmatpush1.bf16.msra.mxu0 %v172
    %230 = vmatprep.subr.bf16.mxu0 %v175
    %231 = vmatpush1.bf16.msra.mxu0 %v174
    %232 = vmatprep.subr.bf16.mxu0 %v177
    %233 = vmatpush1.bf16.msra.mxu0 %v176
    %234 = vmatprep.subr.bf16.mxu0 %v179
    %235 = vmatpush1.bf16.msra.mxu0 %v178
    %236 = vmatprep.subr.bf16.mxu0 %v181
    %237 = vmatpush1.bf16.msra.mxu0 %v180
    %238 = vmatprep.subr.bf16.mxu0 %v183
    %239 = vmatpush1.bf16.msra.mxu0 %v182
    %240 = vmatprep.subr.bf16.mxu0 0
    %241 = vmatpush1.bf16.msra.mxu0 0
    %242 = vmatprep.subr.bf16.mxu0 0
    %243 = vmatpush1.bf16.msra.mxu0 0
    %244 = vmatprep.subr.bf16.mxu0 0
    %245 = vmatpush1.bf16.msra.mxu0 0
    %246 = vmatprep.subr.bf16.mxu0 0
    %247 = vmatpush1.bf16.msra.mxu0 0
    %248 = vmatprep.subr.bf16.mxu0 0
    %249 = vmatpush1.bf16.msra.mxu0 0
    %250 = vmatprep.subr.bf16.mxu0 0
    %251 = vmatpush1.bf16.msra.mxu0 0
    %252 = vmatprep.mubr.bf16.mxu0 %v206
    %253 = vmatmul.mubr.bf16.gmra.mrb[0].mxu0 %v62
    %v254 = vpop.f32.mrb[0].mxu0
    %v255 = vadd.f32 %v97, %v254
    %v256 = vpop.f32.mrb[0].mxu0
    %v257 = vadd.f32 %v101, %v256
    %v258 = vpop.f32.mrb[0].mxu0
    %v259 = vadd.f32 %v97, %v258
    %v260 = vpop.f32.mrb[0].mxu0
    %v261 = vadd.f32 %v101, %v260
    %262 = vmatprep.mubr.bf16.mxu0 %v209
    %263 = vmatmul.mubr.bf16.gmra.mrb[0].mxu0 %v64
    %v264 = vpop.f32.mrb[0].mxu0
    %v265 = vadd.f32 %v97, %v264
    %v266 = vpop.f32.mrb[0].mxu0
    %v267 = vadd.f32 %v101, %v266
    %v268 = vpop.f32.mrb[0].mxu0
    %v269 = vadd.f32 %v97, %v268
    %v270 = vpop.f32.mrb[0].mxu0
    %v271 = vadd.f32 %v101, %v270
    %272 = vmatprep.mubr.bf16.mxu0 %v212
    %273 = vmatmul.mubr.bf16.gmra.mrb[0].mxu0 %v66
    %v274 = vpop.f32.mrb[0].mxu0
    %v275 = vadd.f32 %v97, %v274
    %v276 = vpop.f32.mrb[0].mxu0
    %v277 = vadd.f32 %v101, %v276
    %v278 = vpop.f32.mrb[0].mxu0
    %v279 = vadd.f32 %v97, %v278
    %v280 = vpop.f32.mrb[0].mxu0
    %v281 = vadd.f32 %v101, %v280
    %282 = vmatprep.mubr.bf16.mxu0 %v215
    %283 = vmatmul.mubr.bf16.gmra.mrb[0].mxu0 %v68
    %v284 = vpop.f32.mrb[0].mxu0
    %v285 = vadd.f32 %v97, %v284
    %v286 = vpop.f32.mrb[0].mxu0
    %v287 = vadd.f32 %v101, %v286
    %v288 = vpop.f32.mrb[0].mxu0
    %v289 = vadd.f32 %v97, %v288
    %v290 = vpop.f32.mrb[0].mxu0
    %v291 = vadd.f32 %v101, %v290
    %292 = vmatprep.mubr.bf16.mxu0 %v218
    %293 = vmatmul.mubr.bf16.gmra.mrb[0].mxu0 %v70
    %v294 = vpop.f32.mrb[0].mxu0
    %v295 = vadd.f32 %v97, %v294
    %v296 = vpop.f32.mrb[0].mxu0
    %v297 = vadd.f32 %v101, %v296
    %v298 = vpop.f32.mrb[0].mxu0
    %v299 = vpop.f32.mrb[0].mxu0
    %300 = vdwg.mxu0
    %301 = vst [vmem:[#allocation7] sm:$0xff] %v255
    %302 = vst.msk [vmem:[#allocation7 + $0x8] sm:$0xff] %vm204, %v257
    %303 = vst [vmem:[#allocation7 + $0x10] sm:$0xff] %v259
    %304 = vst.msk [vmem:[#allocation7 + $0x18] sm:$0xff] %vm204, %v261
    %305 = vst [vmem:[#allocation7 + $0x20] sm:$0xff] %v265
    %306 = vst.msk [vmem:[#allocation7 + $0x28] sm:$0xff] %vm204, %v267
    %307 = vst [vmem:[#allocation7 + $0x30] sm:$0xff] %v269
    %308 = vst.msk [vmem:[#allocation7 + $0x38] sm:$0xff] %vm204, %v271
    %309 = vst [vmem:[#allocation7 + $0x40] sm:$0xff] %v275
    %310 = vst.msk [vmem:[#allocation7 + $0x48] sm:$0xff] %vm204, %v277
    %311 = vst [vmem:[#allocation7 + $0x50] sm:$0xff] %v279
    %312 = vst.msk [vmem:[#allocation7 + $0x58] sm:$0xff] %vm204, %v281
    %313 = vst [vmem:[#allocation7 + $0x60] sm:$0xff] %v285
    %314 = vst.msk [vmem:[#allocation7 + $0x68] sm:$0xff] %vm204, %v287
    %315 = vst [vmem:[#allocation7 + $0x70] sm:$0xff] %v289
    %316 = vst.msk [vmem:[#allocation7 + $0x78] sm:$0xff] %vm204, %v291
    %317 = vst [vmem:[#allocation7 + $0x80] sm:$0xff] %v295
    %318 = vst.msk [vmem:[#allocation7 + $0x88] sm:$0xff] %vm204, %v297
    // Predicated region
    $region22: #{tpu_custom_call.1} parent=1 // pred_check
      _
    $region23: #{tpu_custom_call.1} parent=1 // pred_check_branch
      %320 = sbr.rel (0) target = $region25
    $region24: #{tpu_custom_call.1} parent=1 // pred_region
      %s322 = ssub.s32 2304, 2304
      %323 = vsyncadd [#allocation4], %s322
      %s324 = sshll.u32 [#allocation7], 4
      %s325 = int_to_ptr.vmem [resolvable:$true] %s324
      %330 = dma.vmem_to_hbm [thread:$0]  %s325, 2304, %s3, [#allocation4], 256, 256, 16
    $region25: #{tpu_custom_call.1} parent=1 // pred_fallthru
      _
    // Predicated region
    $region26: #{tpu_custom_call.1} parent=1 // pred_check
      _
    $region27: #{tpu_custom_call.1} parent=1 // pred_check_branch
      %332 = sbr.rel (0) target = $region29
    $region28: #{tpu_custom_call.1} parent=1 // pred_region
      %333 = dma.done [#allocation4], 2304
    $region29: #{tpu_custom_call.1} parent=1 // pred_fallthru
      _
    %334 = vsyncpa [#allocation3], 1
    %335 = vsyncpa [#allocation6], 1
    %336 = vsyncpa [#allocation4], 1

</llo_original>
